<compile_context>
chip_gen: v6e
topology: v6e:2x2x1
jax: 0.10.0
libtpu: 0.0.40
codegen_flags: <defaults>
</compile_context>

<pallas_src>
import functools

import jax
import jax.numpy as jnp
from jax.experimental import pallas as pl
from jax.experimental.pallas import tpu as pltpu

LANES = 128


def _round8(n):
    return ((n + 7) // 8) * 8


# ----------------------------- Pallas kernel ------------------------------- #
def _critic_kernel(state_ref, dist_ref, w_ref, bias_ref, out_ref, *,
                   E, A, F1, row_w1, row_w2a, row_w2b):
    # Packed bias / fc_value slab (single (8,128) tile):
    b1 = bias_ref[0:1, :]        # (1, 128) fc1 bias
    b2 = bias_ref[1:2, :]        # (1, 128) fc2 bias   (cols >= F2 are zero)
    w3 = bias_ref[2:3, :]        # (1, 128) fc_value weight row (cols >= F2 zero)
    b3 = bias_ref[3:4, 0:1]      # (1, 1)   fc_value bias

    # fc1 + relu: (TB, E) @ (E, 128)
    h1 = jnp.dot(state_ref[...], w_ref[row_w1:row_w1 + E, :],
                 preferred_element_type=jnp.float32) + b1
    h1 = jnp.maximum(h1, 0.0)

    # fc2 over cat([h1, dist]) in split-weight form + relu.
    # Weight-slab columns >= F2 (and b2 cols >= F2) are zero, so h2[:, F2:] == 0.
    h2 = (jnp.dot(h1, w_ref[row_w2a:row_w2a + F1, :],
                  preferred_element_type=jnp.float32)
          + jnp.dot(dist_ref[...], w_ref[row_w2b:row_w2b + A, :],
                    preferred_element_type=jnp.float32)
          + b2)
    h2 = jnp.maximum(h2, 0.0)

    # fc_value (out_features == 1): VPU multiply + lane reduction instead of a
    # 1-lane-wide MXU matmul. Zero-padded lanes contribute exactly 0.0.
    out_ref[...] = jnp.sum(h2 * w3, axis=-1, keepdims=True) + b3
    # TODO(synk): for B >= ~1024 a lane-dense (1, B) output layout would avoid
    # masked 1-lane stores; kept (B, 1) to match the module's output shape.


# ------------------------------ wrapper ------------------------------------- #
def critic_forward(state, dist, w_slab, bias_slab, *, fc1_units=128):
    """state: (B, E) f32, dist: (B, A) f32 -> (B, 1) f32."""
    B, E = state.shape
    A = dist.shape[1]
    F1 = fc1_units

    row_w1 = 0
    row_w2a = _round8(E)
    row_w2b = row_w2a + _round8(F1)

    # Batch tiling: one tile at small B; 512-row tiles (parallel axis -> both
    # TensorCores on v7x, weights stay resident across tiles) when B is large.
    TB = B if B <= 512 else 512
    grid = (pl.cdiv(B, TB),)

    kernel = functools.partial(
        _critic_kernel, E=E, A=A, F1=F1,
        row_w1=row_w1, row_w2a=row_w2a, row_w2b=row_w2b)

    return pl.pallas_call(
        kernel,
        out_shape=jax.ShapeDtypeStruct((B, 1), jnp.float32),
        grid=grid,
        in_specs=[
            pl.BlockSpec((TB, E), lambda i: (i, 0)),          # state tile
            pl.BlockSpec((TB, A), lambda i: (i, 0)),          # dist tile
            pl.BlockSpec(w_slab.shape, lambda i: (0, 0)),     # packed weights (resident)
            pl.BlockSpec(bias_slab.shape, lambda i: (0, 0)),  # packed biases (resident)
        ],
        out_specs=pl.BlockSpec((TB, 1), lambda i: (i, 0)),
        compiler_params=pltpu.CompilerParams(
            dimension_semantics=("parallel",)),
    )(state, dist, w_slab, bias_slab)


# --------------------------- parameter creation ----------------------------- #
def make_params(key, encoding_size, action_size, fc1_units=128, fc2_units=64):
    """Logical params in (in_features, out_features) layout, PyTorch-style init."""
    k1, k2, k3 = jax.random.split(key, 3)
    # fc1 / fc2: orthogonal weights (init on (out, in) like PyTorch), zero bias.
    w1 = jax.nn.initializers.orthogonal(1.0)(
        k1, (fc1_units, encoding_size), jnp.float32).T            # (E, F1)
    b1 = jnp.zeros((fc1_units,), jnp.float32)
    w2 = jax.nn.initializers.orthogonal(1.0)(
        k2, (fc2_units, fc1_units + action_size), jnp.float32).T  # (F1+A, F2)
    b2 = jnp.zeros((fc2_units,), jnp.float32)
    # fc_value: U(-0.003, 0.003) weights, zero bias.
    w3 = jax.random.uniform(k3, (fc2_units, 1), jnp.float32, -0.003, 0.003)
    b3 = jnp.zeros((1,), jnp.float32)
    return (w1, b1, w2, b2, w3, b3)


def pack_params(params, fc1_units=128, fc2_units=64):
    """Pack all params into one weight slab and one (8,128) bias/fc_value slab."""
    w1, b1, w2, b2, w3, b3 = params
    E = w1.shape[0]
    F1, F2 = fc1_units, fc2_units
    A = w2.shape[0] - F1
    assert F1 <= LANES and F2 <= LANES, "packing assumes hidden widths <= 128"

    row_w1 = 0
    row_w2a = _round8(E)
    row_w2b = row_w2a + _round8(F1)
    n_rows = row_w2b + _round8(A)

    w_slab = jnp.zeros((n_rows, LANES), jnp.float32)
    w_slab = w_slab.at[row_w1:row_w1 + E, 0:F1].set(w1)            # fc1
    w_slab = w_slab.at[row_w2a:row_w2a + F1, 0:F2].set(w2[:F1, :]) # fc2 (h1 part)
    w_slab = w_slab.at[row_w2b:row_w2b + A, 0:F2].set(w2[F1:, :])  # fc2 (dist part)

    bias_slab = jnp.zeros((8, LANES), jnp.float32)
    bias_slab = bias_slab.at[0, 0:F1].set(b1)
    bias_slab = bias_slab.at[1, 0:F2].set(b2)
    bias_slab = bias_slab.at[2, 0:F2].set(w3[:, 0])   # fc_value weights as a row
    bias_slab = bias_slab.at[3, 0].set(b3[0])         # fc_value bias (scalar)
    return w_slab, bias_slab


# ------------------------------ reference ----------------------------------- #
def critic_ref(state, dist, params):
    w1, b1, w2, b2, w3, b3 = params
    h1 = jnp.maximum(state @ w1 + b1, 0.0)
    x = jnp.concatenate([h1, dist], axis=1)
    h2 = jnp.maximum(x @ w2 + b2, 0.0)
    return h2 @ w3 + b3


if __name__ == "__main__":
    B = 8
    encoding_size = 32
    action_size = 12
    fc1_units, fc2_units = 128, 64

    key = jax.random.PRNGKey(0)
    k_state, k_dist, k_params = jax.random.split(key, 3)

    state = jax.random.normal(k_state, (B, encoding_size), jnp.float32)
    logits = jax.random.normal(k_dist, (B, action_size), jnp.float32)
    dist = jax.nn.softmax(logits, axis=-1)  # Categorical-style prob vector

    params = make_params(k_params, encoding_size, action_size, fc1_units, fc2_units)
    w_slab, bias_slab = pack_params(params, fc1_units, fc2_units)

    out = critic_forward(state, dist, w_slab, bias_slab, fc1_units=fc1_units)
    out = jax.block_until_ready(out)

    ref = critic_ref(state, dist, params)
    assert out.shape == (B, 1)
    assert jnp.allclose(out, ref, atol=1e-5, rtol=1e-5), "mismatch vs reference"

    print("KERNEL_OK")
</pallas_src>

<mosaic_0001>
module attributes {stable_mosaic.version = 11 : i64} {
  func.func @_critic_kernel(%arg0: i32, %arg1: memref<8x32xf32, #tpu.memory_space<vmem>>, %arg2: memref<8x12xf32, #tpu.memory_space<vmem>>, %arg3: memref<176x128xf32, #tpu.memory_space<vmem>>, %arg4: memref<8x128xf32, #tpu.memory_space<vmem>>, %arg5: memref<8x1xf32, #tpu.memory_space<vmem>>) attributes {dimension_semantics = [#tpu.dimension_semantics<parallel>], iteration_bounds = array<i64: 1>, scalar_prefetch = 0 : i64, scratch_operands = 0 : i64, tpu.core_type = #tpu.core_type<tc>, window_params = [{transform_indices = @transform_0, window_bounds = array<i64: 8, 32>}, {transform_indices = @transform_1, window_bounds = array<i64: 8, 12>}, {pipeline_mode = #tpu.pipeline_mode<synchronous>, transform_indices = @transform_2, window_bounds = array<i64: 176, 128>}, {pipeline_mode = #tpu.pipeline_mode<synchronous>, transform_indices = @transform_3, window_bounds = array<i64: 8, 128>}, {transform_indices = @transform_4, window_bounds = array<i64: 8, 1>}]} {
    %c0 = arith.constant 0 : index
    %c0_0 = arith.constant 0 : index
    %0 = vector.load %arg4[%c0, %c0_0] : memref<8x128xf32, #tpu.memory_space<vmem>>, vector<1x128xf32>
    %c1 = arith.constant 1 : index
    %c0_1 = arith.constant 0 : index
    %1 = vector.load %arg4[%c1, %c0_1] : memref<8x128xf32, #tpu.memory_space<vmem>>, vector<1x128xf32>
    %c2 = arith.constant 2 : index
    %c0_2 = arith.constant 0 : index
    %2 = vector.load %arg4[%c2, %c0_2] : memref<8x128xf32, #tpu.memory_space<vmem>>, vector<1x128xf32>
    %c3 = arith.constant 3 : index
    %c0_3 = arith.constant 0 : index
    %3 = vector.load %arg4[%c3, %c0_3] : memref<8x128xf32, #tpu.memory_space<vmem>>, vector<1x1xf32>
    %c0_4 = arith.constant 0 : index
    %c0_5 = arith.constant 0 : index
    %4 = vector.load %arg1[%c0_4, %c0_5] : memref<8x32xf32, #tpu.memory_space<vmem>>, vector<8x32xf32>
    %c0_6 = arith.constant 0 : index
    %c0_7 = arith.constant 0 : index
    %5 = vector.load %arg3[%c0_6, %c0_7] : memref<176x128xf32, #tpu.memory_space<vmem>>, vector<32x128xf32>
    %cst = arith.constant dense<0.000000e+00> : vector<8x128xf32>
    %6 = tpu.matmul %4, %5, %cst {dimension_numbers = #tpu.dot_dimension_numbers<[1], [0], [0], [1], [0, 0, 1, 1], [], []>} : vector<8x32xf32>, vector<32x128xf32>, vector<8x128xf32> -> vector<8x128xf32>
    %7 = vector.broadcast %0 : vector<1x128xf32> to vector<8x128xf32>
    %8 = arith.addf %6, %7 : vector<8x128xf32>
    %cst_8 = arith.constant 0.000000e+00 : f32
    %9 = vector.broadcast %cst_8 : f32 to vector<8x128xf32>
    %10 = arith.maximumf %8, %9 : vector<8x128xf32>
    %c32 = arith.constant 32 : index
    %c0_9 = arith.constant 0 : index
    %11 = vector.load %arg3[%c32, %c0_9] : memref<176x128xf32, #tpu.memory_space<vmem>>, vector<128x128xf32>
    %cst_10 = arith.constant dense<0.000000e+00> : vector<8x128xf32>
    %12 = tpu.matmul %10, %11, %cst_10 {dimension_numbers = #tpu.dot_dimension_numbers<[1], [0], [0], [1], [0, 0, 1, 1], [], []>} : vector<8x128xf32>, vector<128x128xf32>, vector<8x128xf32> -> vector<8x128xf32>
    %c0_11 = arith.constant 0 : index
    %c0_12 = arith.constant 0 : index
    %13 = vector.load %arg2[%c0_11, %c0_12] : memref<8x12xf32, #tpu.memory_space<vmem>>, vector<8x12xf32>
    %c160 = arith.constant 160 : index
    %c0_13 = arith.constant 0 : index
    %14 = vector.load %arg3[%c160, %c0_13] : memref<176x128xf32, #tpu.memory_space<vmem>>, vector<12x128xf32>
    %cst_14 = arith.constant dense<0.000000e+00> : vector<8x128xf32>
    %15 = tpu.matmul %13, %14, %cst_14 {dimension_numbers = #tpu.dot_dimension_numbers<[1], [0], [0], [1], [0, 0, 1, 1], [], []>} : vector<8x12xf32>, vector<12x128xf32>, vector<8x128xf32> -> vector<8x128xf32>
    %16 = arith.addf %12, %15 : vector<8x128xf32>
    %17 = vector.broadcast %1 : vector<1x128xf32> to vector<8x128xf32>
    %18 = arith.addf %16, %17 : vector<8x128xf32>
    %cst_15 = arith.constant 0.000000e+00 : f32
    %19 = vector.broadcast %cst_15 : f32 to vector<8x128xf32>
    %20 = arith.maximumf %18, %19 : vector<8x128xf32>
    %21 = vector.broadcast %2 : vector<1x128xf32> to vector<8x128xf32>
    %22 = arith.mulf %20, %21 : vector<8x128xf32>
    %cst_16 = arith.constant dense<0.000000e+00> : vector<8xf32>
    %23 = vector.multi_reduction <add>, %22, %cst_16 [1] : vector<8x128xf32> to vector<8xf32>
    %24 = vector.shape_cast %23 : vector<8xf32> to vector<8x1xf32>
    %25 = vector.broadcast %3 : vector<1x1xf32> to vector<8x1xf32>
    %26 = arith.addf %24, %25 : vector<8x1xf32>
    %c0_17 = arith.constant 0 : index
    %c0_18 = arith.constant 0 : index
    %27 = vector.load %arg5[%c0_17, %c0_18] : memref<8x1xf32, #tpu.memory_space<vmem>>, vector<8x1xf32>
    tpu.vector_store %arg5[%c0_17, %c0_18], %26 {strides = array<i32>} : memref<8x1xf32, #tpu.memory_space<vmem>>, vector<8x1xf32>,
    return
  }
  func.func @transform_0(%arg0: i32) -> (i32, i32) {
    %c0_i32 = arith.constant 0 : i32
    %c0_i32_0 = arith.constant 0 : i32
    return %arg0, %c0_i32 : i32, i32
  }
  func.func @transform_1(%arg0: i32) -> (i32, i32) {
    %c0_i32 = arith.constant 0 : i32
    %c0_i32_0 = arith.constant 0 : i32
    return %arg0, %c0_i32 : i32, i32
  }
  func.func @transform_2(%arg0: i32) -> (i32, i32) {
    %c0_i32 = arith.constant 0 : i32
    %c0_i32_0 = arith.constant 0 : i32
    %c0_i32_1 = arith.constant 0 : i32
    return %c0_i32, %c0_i32_0 : i32, i32
  }
  func.func @transform_3(%arg0: i32) -> (i32, i32) {
    %c0_i32 = arith.constant 0 : i32
    %c0_i32_0 = arith.constant 0 : i32
    %c0_i32_1 = arith.constant 0 : i32
    return %c0_i32, %c0_i32_0 : i32, i32
  }
  func.func @transform_4(%arg0: i32) -> (i32, i32) {
    %c0_i32 = arith.constant 0 : i32
    %c0_i32_0 = arith.constant 0 : i32
    return %arg0, %c0_i32 : i32, i32
  }
}

</mosaic_0001>

<llo_original>
// kernel: tpu_custom_call.1
$region0: #{tpu_custom_call.1}
  #allocation0 [shape = 'u32[]', space=smem, size = 0x4, offset = 0x4, fixed_abs, tag = 'smem constant byte address 0x4 - core index']
  #allocation1 [shape = 'u32[144,128]{1,0:T(1,128)}', space=vmem, size = 0x12000, scoped, tag = 'internal scratch']
  %s0 = inlined_call_operand.hbm [shape: f32[8,32], index: 0, kind: input, shape index: {}]
  %s1 = inlined_call_operand.hbm [shape: f32[8,12], index: 1, kind: input, shape index: {}]
  %s2 = inlined_call_operand.hbm [shape: f32[176,128], index: 2, kind: input, shape index: {}]
  %s3 = inlined_call_operand.hbm [shape: f32[8,128], index: 3, kind: input, shape index: {}]
  %s4 = inlined_call_operand.vmem [shape: f32[8,1], index: 4, kind: output, shape index: {}]
  %s5 = sld [smem:[#allocation0]]
  $region42: #{tpu_custom_call.1} parent=0
    _
  %s7 = ssub.s32 1, %s5
  %s8 = scalar_select 0, %s7, %s5
  $region1: #{tpu_custom_call.1} parent=0
    #allocation2 [shape = 'u8[4096]{0}', space=vmem, size = 0x1000, scoped, tag = 'input window, operand 0, single buffered']
    #allocation3 [shape = 's32[1]{0}', space=sflag, size = 0x4, scoped, tag = 'scoped memory for tpu_custom_call.1']
    #allocation4 [shape = 'u8[4096]{0}', space=vmem, size = 0x1000, scoped, tag = 'input window, operand 1, single buffered']
    #allocation5 [shape = 's32[1]{0}', space=sflag, size = 0x4, scoped, tag = 'scoped memory for tpu_custom_call.1']
    #allocation6 [shape = 'u8[90112]{0}', space=vmem, size = 0x16000, scoped, tag = 'input window, operand 2, single buffered']
    #allocation7 [shape = 'u8[4096]{0}', space=vmem, size = 0x1000, scoped, tag = 'input window, operand 3, single buffered']
    #allocation8 [shape = 's32[1]{0}', space=sflag, size = 0x4, scoped, tag = 'scoped memory for tpu_custom_call.1']
    %9 = vsyncpa [#allocation3], 0
    %10 = vsyncpa [#allocation5], 0
    %11 = vsyncpa [#allocation8], 0
    // Predicated region
    $region2: #{tpu_custom_call.1} parent=1 // pred_check
      _
    $region3: #{tpu_custom_call.1} parent=1 // pred_check_branch
      %13 = sbr.rel (0) target = $region5
    $region4: #{tpu_custom_call.1} parent=1 // pred_region
      %s15 = ssub.s32 128, 128
      %16 = vsyncadd [#allocation3], %s15
      %s18 = sshll.u32 [#allocation2], 4
      %s19 = int_to_ptr.vmem [resolvable:$true] %s18
      %21 = dma.hbm_to_vmem [thread:$0]  %s0, 128, %s19, [#allocation3]
    $region5: #{tpu_custom_call.1} parent=1 // pred_fallthru
      _
    // Predicated region
    $region6: #{tpu_custom_call.1} parent=1 // pred_check
      _
    $region7: #{tpu_custom_call.1} parent=1 // pred_check_branch
      %23 = sbr.rel (0) target = $region9
    $region8: #{tpu_custom_call.1} parent=1 // pred_region
      %s25 = ssub.s32 128, 128
      %26 = vsyncadd [#allocation5], %s25
      %s28 = sshll.u32 [#allocation4], 4
      %s29 = int_to_ptr.vmem [resolvable:$true] %s28
      %31 = dma.hbm_to_vmem [thread:$0]  %s1, 128, %s29, [#allocation5]
    $region9: #{tpu_custom_call.1} parent=1 // pred_fallthru
      _
    // Predicated region
    $region10: #{tpu_custom_call.1} parent=1 // pred_check
      _
    $region11: #{tpu_custom_call.1} parent=1 // pred_check_branch
      %33 = sbr.rel (0) target = $region13
    $region12: #{tpu_custom_call.1} parent=1 // pred_region
      %s35 = ssub.s32 2816, 2816
      %36 = vsyncadd [#allocation5], %s35
      %s37 = sshll.u32 [#allocation6], 4
      %s38 = int_to_ptr.vmem [resolvable:$true] %s37
      %43 = dma.hbm_to_vmem [thread:$0]  %s2, 2816, %s38, [#allocation5], 128, 128, 8
    $region13: #{tpu_custom_call.1} parent=1 // pred_fallthru
      _
    // Predicated region
    $region14: #{tpu_custom_call.1} parent=1 // pred_check
      _
    $region15: #{tpu_custom_call.1} parent=1 // pred_check_branch
      %45 = sbr.rel (0) target = $region17
    $region16: #{tpu_custom_call.1} parent=1 // pred_region
      %s47 = ssub.s32 128, 128
      %48 = vsyncadd [#allocation8], %s47
      %s50 = sshll.u32 [#allocation7], 4
      %s51 = int_to_ptr.vmem [resolvable:$true] %s50
      %53 = dma.hbm_to_vmem [thread:$0]  %s3, 128, %s51, [#allocation8]
    $region17: #{tpu_custom_call.1} parent=1 // pred_fallthru
      _
    // Predicated region
    $region18: #{tpu_custom_call.1} parent=1 // pred_check
      _
    $region19: #{tpu_custom_call.1} parent=1 // pred_check_branch
      %55 = sbr.rel (0) target = $region21
    $region20: #{tpu_custom_call.1} parent=1 // pred_region
      %56 = dma.done [#allocation3], 128
    $region21: #{tpu_custom_call.1} parent=1 // pred_fallthru
      _
    // Predicated region
    $region22: #{tpu_custom_call.1} parent=1 // pred_check
      _
    $region23: #{tpu_custom_call.1} parent=1 // pred_check_branch
      %58 = sbr.rel (0) target = $region25
    $region24: #{tpu_custom_call.1} parent=1 // pred_region
      %59 = dma.done [#allocation5], 128
    $region25: #{tpu_custom_call.1} parent=1 // pred_fallthru
      _
    // Predicated region
    $region26: #{tpu_custom_call.1} parent=1 // pred_check
      _
    $region27: #{tpu_custom_call.1} parent=1 // pred_check_branch
      %61 = sbr.rel (0) target = $region29
    $region28: #{tpu_custom_call.1} parent=1 // pred_region
      %62 = dma.done [#allocation5], 2816
    $region29: #{tpu_custom_call.1} parent=1 // pred_fallthru
      _
    // Predicated region
    $region30: #{tpu_custom_call.1} parent=1 // pred_check
      _
    $region31: #{tpu_custom_call.1} parent=1 // pred_check_branch
      %64 = sbr.rel (0) target = $region33
    $region32: #{tpu_custom_call.1} parent=1 // pred_region
      %65 = dma.done [#allocation8], 128
    $region33: #{tpu_custom_call.1} parent=1 // pred_fallthru
      _
    %v66 = vld [vmem:[#allocation7] sm:$0x1]
    %v67 = vld [vmem:[#allocation7 + $0x1] sm:$0x1]
    %v68 = vld [vmem:[#allocation7 + $0x2] sm:$0x1]
    %v69 = vld [vmem:[#allocation7 + $0x3] sm:$0x1]
    %v70 = vld [vmem:[#allocation2] sm:$0xff]
    %v71 = vld [vmem:[#allocation6] sm:$0xff]
    %v72 = vld [vmem:[#allocation6 + $0x8] sm:$0xff]
    %v73 = vld [vmem:[#allocation6 + $0x10] sm:$0xff]
    %v74 = vld [vmem:[#allocation6 + $0x18] sm:$0xff]
    %v75 = vlaneseq
    %v76 = vshrl.u32 %v75, 7
    %v77 = vsub.s32 0, %v76
    %v78 = vrot.slane %v66, %v77
    %vm79 = vcmask 261120
    %v81 = vsel %vm79, %v70, 0
    %83 = vmatprep.subr.mxu0 0.0
    %84 = vmatpush1.msra.mxu0 0.0
    %85 = vmatprep.subr.mxu0 0.0
    %86 = vmatpush1.msra.mxu0 0.0
    %87 = vmatprep.subr.mxu0 0.0
    %88 = vmatpush1.msra.mxu0 0.0
    %89 = vmatprep.subr.mxu0 0.0
    %90 = vmatpush1.msra.mxu0 0.0
    %91 = vmatprep.subr.mxu0 0.0
    %92 = vmatpush1.msra.mxu0 0.0
    %93 = vmatprep.subr.mxu0 0.0
    %94 = vmatpush1.msra.mxu0 0.0
    %95 = vmatprep.subr.mxu0 0.0
    %96 = vmatpush1.msra.mxu0 0.0
    %97 = vmatprep.subr.mxu0 0.0
    %98 = vmatpush1.msra.mxu0 0.0
    %99 = vmatprep.subr.mxu0 0.0
    %100 = vmatpush1.msra.mxu0 0.0
    %101 = vmatprep.subr.mxu0 0.0
    %102 = vmatpush1.msra.mxu0 0.0
    %103 = vmatprep.subr.mxu0 0.0
    %104 = vmatpush1.msra.mxu0 0.0
    %105 = vmatprep.subr.mxu0 0.0
    %106 = vmatpush1.msra.mxu0 0.0
    %107 = vmatprep.subr.mxu0 0.0
    %108 = vmatpush1.msra.mxu0 %v74
    %109 = vmatprep.subr.mxu0 0.0
    %110 = vmatpush1.msra.mxu0 %v73
    %111 = vmatprep.subr.mxu0 0.0
    %112 = vmatpush1.msra.mxu0 %v72
    %113 = vmatprep.subr.mxu0 0.0
    %114 = vmatpush1.msra.mxu0 %v71
    %115 = vmatprep.subr.mxu0 0.0
    %116 = vmatpush2.msra.mxu0 0.0
    %117 = vmatprep.subr.mxu0 0.0
    %118 = vmatpush2.msra.mxu0 0.0
    %119 = vmatprep.subr.mxu0 0.0
    %120 = vmatpush2.msra.mxu0 0.0
    %121 = vmatprep.subr.mxu0 0.0
    %122 = vmatpush2.msra.mxu0 0.0
    %123 = vmatprep.subr.mxu0 0.0
    %124 = vmatpush2.msra.mxu0 0.0
    %125 = vmatprep.subr.mxu0 0.0
    %126 = vmatpush2.msra.mxu0 0.0
    %127 = vmatprep.subr.mxu0 0.0
    %128 = vmatpush2.msra.mxu0 0.0
    %129 = vmatprep.subr.mxu0 0.0
    %130 = vmatpush2.msra.mxu0 0.0
    %131 = vmatprep.subr.mxu0 0.0
    %132 = vmatpush2.msra.mxu0 0.0
    %133 = vmatprep.subr.mxu0 0.0
    %134 = vmatpush2.msra.mxu0 0.0
    %135 = vmatprep.subr.mxu0 0.0
    %136 = vmatpush2.msra.mxu0 0.0
    %137 = vmatprep.subr.mxu0 0.0
    %138 = vmatpush2.msra.mxu0 0.0
    %139 = vmatprep.subr.mxu0 0.0
    %140 = vmatpush2.msra.mxu0 0.0
    %141 = vmatprep.subr.mxu0 0.0
    %142 = vmatpush2.msra.mxu0 0.0
    %143 = vmatprep.subr.mxu0 0.0
    %144 = vmatpush2.msra.mxu0 0.0
    %145 = vmatprep.subr.mxu0 0.0
    %146 = vmatpush2.msra.mxu0 0.0
    %147 = vmatprep.mubr.f32.mxu0 0.0
    %148 = vmatmul.mubr.f32.gmra.mxu0 %v81
    %v149 = vpop.f32.mrf.mxu0
    %v150 = vadd.f32 %v78, %v149
    %v151 = vpop.f32.mrf.mxu0
    %152 = vdwg.mxu0
    %v153 = vmax.f32 %v150, 0.0
    %v154 = vld [vmem:[#allocation6 + $0x20] sm:$0xff]
    %v155 = vld [vmem:[#allocation6 + $0x28] sm:$0xff]
    %v156 = vld [vmem:[#allocation6 + $0x30] sm:$0xff]
    %v157 = vld [vmem:[#allocation6 + $0x38] sm:$0xff]
    %v158 = vld [vmem:[#allocation6 + $0x40] sm:$0xff]
    %v159 = vld [vmem:[#allocation6 + $0x48] sm:$0xff]
    %v160 = vld [vmem:[#allocation6 + $0x50] sm:$0xff]
    %v161 = vld [vmem:[#allocation6 + $0x58] sm:$0xff]
    %v162 = vld [vmem:[#allocation6 + $0x60] sm:$0xff]
    %v163 = vld [vmem:[#allocation6 + $0x68] sm:$0xff]
    %v164 = vld [vmem:[#allocation6 + $0x70] sm:$0xff]
    %v165 = vld [vmem:[#allocation6 + $0x78] sm:$0xff]
    %v166 = vld [vmem:[#allocation6 + $0x80] sm:$0xff]
    %v167 = vld [vmem:[#allocation6 + $0x88] sm:$0xff]
    %v168 = vld [vmem:[#allocation6 + $0x90] sm:$0xff]
    %v169 = vld [vmem:[#allocation6 + $0x98] sm:$0xff]
    %v170 = vld [vmem:[#allocation4] sm:$0xff]
    %v171 = vld [vmem:[#allocation6 + $0xa0] sm:$0xff]
    %v172 = vld [vmem:[#allocation6 + $0xa8] sm:$0xf]
    %vm173 = vcmask 97280
    %v175 = vsel %vm173, %v170, 0
    %vm177 = vcmask 1043456
    %v179 = vsel %vm177, %v172, 0
    %181 = vmatprep.subr.mxu0 0.0
    %182 = vmatpush1.msra.mxu0 0.0
    %183 = vmatprep.subr.mxu0 0.0
    %184 = vmatpush1.msra.mxu0 0.0
    %185 = vmatprep.subr.mxu0 0.0
    %186 = vmatpush1.msra.mxu0 0.0
    %187 = vmatprep.subr.mxu0 0.0
    %188 = vmatpush1.msra.mxu0 0.0
    %189 = vmatprep.subr.mxu0 0.0
    %190 = vmatpush1.msra.mxu0 0.0
    %191 = vmatprep.subr.mxu0 0.0
    %192 = vmatpush1.msra.mxu0 0.0
    %193 = vmatprep.subr.mxu0 0.0
    %194 = vmatpush1.msra.mxu0 0.0
    %195 = vmatprep.subr.mxu0 0.0
    %196 = vmatpush1.msra.mxu0 0.0
    %197 = vmatprep.subr.mxu0 0.0
    %198 = vmatpush1.msra.mxu0 0.0
    %199 = vmatprep.subr.mxu0 0.0
    %200 = vmatpush1.msra.mxu0 0.0
    %201 = vmatprep.subr.mxu0 0.0
    %202 = vmatpush1.msra.mxu0 0.0
    %203 = vmatprep.subr.mxu0 0.0
    %204 = vmatpush1.msra.mxu0 0.0
    %205 = vmatprep.subr.mxu0 0.0
    %206 = vmatpush1.msra.mxu0 0.0
    %207 = vmatprep.subr.mxu0 0.0
    %208 = vmatpush1.msra.mxu0 0.0
    %209 = vmatprep.subr.mxu0 0.0
    %210 = vmatpush1.msra.mxu0 %v179
    %211 = vmatprep.subr.mxu0 0.0
    %212 = vmatpush1.msra.mxu0 %v171
    %213 = vmatprep.subr.mxu0 0.0
    %214 = vmatpush2.msra.mxu0 0.0
    %215 = vmatprep.subr.mxu0 0.0
    %216 = vmatpush2.msra.mxu0 0.0
    %217 = vmatprep.subr.mxu0 0.0
    %218 = vmatpush2.msra.mxu0 0.0
    %219 = vmatprep.subr.mxu0 0.0
    %220 = vmatpush2.msra.mxu0 0.0
    %221 = vmatprep.subr.mxu0 0.0
    %222 = vmatpush2.msra.mxu0 0.0
    %223 = vmatprep.subr.mxu0 0.0
    %224 = vmatpush2.msra.mxu0 0.0
    %225 = vmatprep.subr.mxu0 0.0
    %226 = vmatpush2.msra.mxu0 0.0
    %227 = vmatprep.subr.mxu0 0.0
    %228 = vmatpush2.msra.mxu0 0.0
    %229 = vmatprep.subr.mxu0 0.0
    %230 = vmatpush2.msra.mxu0 0.0
    %231 = vmatprep.subr.mxu0 0.0
    %232 = vmatpush2.msra.mxu0 0.0
    %233 = vmatprep.subr.mxu0 0.0
    %234 = vmatpush2.msra.mxu0 0.0
    %235 = vmatprep.subr.mxu0 0.0
    %236 = vmatpush2.msra.mxu0 0.0
    %237 = vmatprep.subr.mxu0 0.0
    %238 = vmatpush2.msra.mxu0 0.0
    %239 = vmatprep.subr.mxu0 0.0
    %240 = vmatpush2.msra.mxu0 0.0
    %241 = vmatprep.subr.mxu0 0.0
    %242 = vmatpush2.msra.mxu0 0.0
    %243 = vmatprep.subr.mxu0 0.0
    %244 = vmatpush2.msra.mxu0 0.0
    %245 = vmatprep.mubr.f32.mxu0 0.0
    %246 = vmatmul.mubr.f32.gmra.mxu0 %v175
    %v247 = vpop.f32.mrf.mxu0
    %v248 = vadd.f32 0.0, %v247
    %v249 = vpop.f32.mrf.mxu0
    %250 = vdwg.mxu0
    %251 = vmatprep.subr.mxu0 0.0
    %252 = vmatpush1.msra.mxu0 %v169
    %253 = vmatprep.subr.mxu0 0.0
    %254 = vmatpush1.msra.mxu0 %v168
    %255 = vmatprep.subr.mxu0 0.0
    %256 = vmatpush1.msra.mxu0 %v167
    %257 = vmatprep.subr.mxu0 0.0
    %258 = vmatpush1.msra.mxu0 %v166
    %259 = vmatprep.subr.mxu0 0.0
    %260 = vmatpush1.msra.mxu0 %v165
    %261 = vmatprep.subr.mxu0 0.0
    %262 = vmatpush1.msra.mxu0 %v164
    %263 = vmatprep.subr.mxu0 0.0
    %264 = vmatpush1.msra.mxu0 %v163
    %265 = vmatprep.subr.mxu0 0.0
    %266 = vmatpush1.msra.mxu0 %v162
    %267 = vmatprep.subr.mxu0 0.0
    %268 = vmatpush1.msra.mxu0 %v161
    %269 = vmatprep.subr.mxu0 0.0
    %270 = vmatpush1.msra.mxu0 %v160
    %271 = vmatprep.subr.mxu0 0.0
    %272 = vmatpush1.msra.mxu0 %v159
    %273 = vmatprep.subr.mxu0 0.0
    %274 = vmatpush1.msra.mxu0 %v158
    %275 = vmatprep.subr.mxu0 0.0
    %276 = vmatpush1.msra.mxu0 %v157
    %277 = vmatprep.subr.mxu0 0.0
    %278 = vmatpush1.msra.mxu0 %v156
    %279 = vmatprep.subr.mxu0 0.0
    %280 = vmatpush1.msra.mxu0 %v155
    %281 = vmatprep.subr.mxu0 0.0
    %282 = vmatpush1.msra.mxu0 %v154
    %283 = vmatprep.subr.mxu0 0.0
    %284 = vmatpush2.msra.mxu0 0.0
    %285 = vmatprep.subr.mxu0 0.0
    %286 = vmatpush2.msra.mxu0 0.0
    %287 = vmatprep.subr.mxu0 0.0
    %288 = vmatpush2.msra.mxu0 0.0
    %289 = vmatprep.subr.mxu0 0.0
    %290 = vmatpush2.msra.mxu0 0.0
    %291 = vmatprep.subr.mxu0 0.0
    %292 = vmatpush2.msra.mxu0 0.0
    %293 = vmatprep.subr.mxu0 0.0
    %294 = vmatpush2.msra.mxu0 0.0
    %295 = vmatprep.subr.mxu0 0.0
    %296 = vmatpush2.msra.mxu0 0.0
    %297 = vmatprep.subr.mxu0 0.0
    %298 = vmatpush2.msra.mxu0 0.0
    %299 = vmatprep.subr.mxu0 0.0
    %300 = vmatpush2.msra.mxu0 0.0
    %301 = vmatprep.subr.mxu0 0.0
    %302 = vmatpush2.msra.mxu0 0.0
    %303 = vmatprep.subr.mxu0 0.0
    %304 = vmatpush2.msra.mxu0 0.0
    %305 = vmatprep.subr.mxu0 0.0
    %306 = vmatpush2.msra.mxu0 0.0
    %307 = vmatprep.subr.mxu0 0.0
    %308 = vmatpush2.msra.mxu0 0.0
    %309 = vmatprep.subr.mxu0 0.0
    %310 = vmatpush2.msra.mxu0 0.0
    %311 = vmatprep.subr.mxu0 0.0
    %312 = vmatpush2.msra.mxu0 0.0
    %313 = vmatprep.subr.mxu0 0.0
    %314 = vmatpush2.msra.mxu0 0.0
    %315 = vmatprep.mubr.f32.mxu0 0.0
    %316 = vmatmul.mubr.f32.gmra.mxu0 %v153
    %v317 = vpop.f32.mrf.mxu0
    %v318 = vadd.f32 %v248, %v317
    %v319 = vpop.f32.mrf.mxu0
    %320 = vdwg.mxu0
    %v321 = vlaneseq
    %v322 = vshrl.u32 %v321, 7
    %v323 = vsub.s32 0, %v322
    %v324 = vrot.slane %v67, %v323
    %v325 = vadd.f32 %v318, %v324
    %v326 = vmax.f32 %v325, 0.0
    %v327 = vlaneseq
    %v328 = vshrl.u32 %v327, 7
    %v329 = vsub.s32 0, %v328
    %v330 = vrot.slane %v68, %v329
    %v331 = vmul.f32 %v326, %v330
    %332 = vadd.xlane.f32.xlu0 %v331
    %v333 = vpop.xlane.xlu0 %332
    %v334 = vlaneseq
    %v335 = vshrl.u32 %v334, 7
    %v336 = vsub.s32 0, %v335
    %v337 = vrot.slane %v69, %v336
    %v338 = vadd.f32 %v333, %v337
    %vm339 = vcmask 7168
    %340 = vst.msk [vmem:[%s4] sm:$0xff] %vm339, %v338
    // Predicated region
    $region34: #{tpu_custom_call.1} parent=1 // pred_check
      _
    $region35: #{tpu_custom_call.1} parent=1 // pred_check_branch
      %342 = sbr.rel (0) target = $region37
    $region36: #{tpu_custom_call.1} parent=1 // pred_region
      _
    $region37: #{tpu_custom_call.1} parent=1 // pred_fallthru
      _
    // Predicated region
    $region38: #{tpu_custom_call.1} parent=1 // pred_check
      _
    $region39: #{tpu_custom_call.1} parent=1 // pred_check_branch
      %344 = sbr.rel (0) target = $region41
    $region40: #{tpu_custom_call.1} parent=1 // pred_region
      _
    $region41: #{tpu_custom_call.1} parent=1 // pred_fallthru
      _
    %345 = vsyncpa [#allocation3], 1
    %346 = vsyncpa [#allocation5], 1
    %347 = vsyncpa [#allocation8], 1

</llo_original>
